<compile_context>
chip_gen: v7x
topology: tpu7x:2x2x1
jax: 0.10.0
libtpu: 0.0.40
codegen_flags: <defaults>
</compile_context>

<pallas_src>
import functools

import jax
import jax.numpy as jnp
from jax.experimental import pallas as pl
from jax.experimental.pallas import tpu as pltpu


def _round_up(x, m):
    return ((x + m - 1) // m) * m


def _linear_kernel(x_ref, w_ref, b_ref, o_ref, acc_ref):
    """One (tb, tc) output tile of  x @ w + b  with f32 accumulation over k."""
    k = pl.program_id(3)

    @pl.when(k == 0)
    def _():
        acc_ref[...] = jnp.zeros_like(acc_ref)

    acc_ref[...] += jnp.dot(
        x_ref[...], w_ref[...], preferred_element_type=jnp.float32
    )

    @pl.when(k == pl.num_programs(3) - 1)
    def _():
        # Bias add / cast epilogue kept in f32 (v5e has no bf16 VPU path).
        o_ref[...] = (acc_ref[...] + b_ref[...].astype(jnp.float32)).astype(
            o_ref.dtype
        )


def _tiled_linear(x, w, b, *, tb, tc, tk):
    """Batched tiled linear: x (G,Bp,Fp), w (G,Fp,Np), b (G,1,Np) -> (G,Bp,Np)."""
    G, Bp, Fp = x.shape
    Np = w.shape[2]
    grid = (G, Np // tc, Bp // tb, Fp // tk)

    itemsize = x.dtype.itemsize
    cost = pl.CostEstimate(
        flops=int(2 * G * Bp * Np * Fp),
        transcendentals=0,
        bytes_accessed=int((x.size + w.size + b.size + G * Bp * Np) * itemsize),
    )

    return pl.pallas_call(
        _linear_kernel,
        out_shape=jax.ShapeDtypeStruct((G, Bp, Np), x.dtype),
        grid=grid,
        in_specs=[
            # Features: index independent of the C-tile axis.
            pl.BlockSpec((None, tb, tk), lambda g, c, b, k: (g, b, k)),
            # Weights (pre-transposed (F, C) layout): independent of the
            # B-tile axis -> stays resident in VMEM across the B loop when
            # the K extent is 1, cutting weight HBM traffic.
            pl.BlockSpec((None, tk, tc), lambda g, c, b, k: (g, k, c)),
            # Bias: one lane-dense (1, tc) strip per (g, c).
            pl.BlockSpec((None, 1, tc), lambda g, c, b, k: (g, 0, c)),
        ],
        out_specs=pl.BlockSpec((None, tb, tc), lambda g, c, b, k: (g, b, c)),
        scratch_shapes=[pltpu.VMEM((tb, tc), jnp.float32)],
        compiler_params=pltpu.CompilerParams(
            dimension_semantics=("parallel", "parallel", "parallel", "arbitrary"),
        ),
        cost_estimate=cost,
    )(x, w, b)


def _pick_n_tile(n):
    # MXU-aligned N tile: 256 when it divides (v6e/v7x MXU), else 128 (v5e-safe).
    return 256 if n % 256 == 0 else 128


def _pick_k_tile(k):
    for t in (512, 256, 128):
        if k % t == 0:
            return t
    return 128


def _pick_b_tile(b):
    return 256 if b >= 256 else _round_up(b, 8)


@functools.partial(jax.jit, static_argnames=("mode",))
def classifiers_forward(feats, weights, biases, mode):
    """Pallas equivalent of Classifiers.forward.

    feats  : (D, B, F) if mode == 'multi', else (B, F) shared across heads
    weights: (D, C, F)   (PyTorch nn.Linear layout)
    biases : (D, 1, C)
    returns: stacked logits (D, B, C); out[i] == modlist[i](feats[i]) for
             'multi', or modlist[i](feats) otherwise.  (Stacked output instead
             of a Python list avoids D extra device arrays / dispatches.)
    """
    D, C, F = weights.shape
    dtype = feats.dtype

    Fp = _round_up(F, 128)   # contraction dim, lane-aligned
    Cp = _round_up(C, 128)   # per-head output dim, lane-dense

    # One-time layout plumbing on the (static) params: transpose to (D, F, C)
    # so the MXU RHS needs no in-kernel transpose, then zero-pad.
    wt = jnp.transpose(weights, (0, 2, 1)).astype(dtype)                # (D, F, C)
    wt = jnp.pad(wt, ((0, 0), (0, Fp - F), (0, Cp - C)))                # (D, Fp, Cp)
    bp = jnp.pad(biases.reshape(D, C).astype(dtype), ((0, 0), (0, Cp - C)))  # (D, Cp)

    tk = _pick_k_tile(Fp)

    if mode == "multi":
        assert feats.ndim == 3 and feats.shape[0] == D
        B = feats.shape[1]
        tb = _pick_b_tile(B)
        Bp = _round_up(B, tb)
        x = jnp.pad(feats, ((0, 0), (0, Bp - B), (0, Fp - F)))          # (D, Bp, Fp)
        b = bp.reshape(D, 1, Cp)
        tc = _pick_n_tile(Cp)
        out = _tiled_linear(x, wt, b, tb=tb, tc=tc, tk=tk)              # (D, Bp, Cp)
        return out[:, :B, :C]

    # Shared-feature mode: fuse the D heads into one lane-dense GEMM
    #   (Bp, Fp) @ (Fp, D*Cp)  ->  (Bp, D*Cp),  then split per head.
    assert feats.ndim == 2
    B = feats.shape[0]
    tb = _pick_b_tile(B)
    Bp = _round_up(B, tb)
    x = jnp.pad(feats, ((0, Bp - B), (0, Fp - F)))[None]                # (1, Bp, Fp)
    w_all = jnp.transpose(wt, (1, 0, 2)).reshape(Fp, D * Cp)[None]      # (1, Fp, D*Cp)
    b_all = bp.reshape(1, 1, D * Cp)
    tc = _pick_n_tile(D * Cp)
    out = _tiled_linear(x, w_all, b_all, tb=tb, tc=tc, tk=tk)           # (1, Bp, D*Cp)
    out = out[0].reshape(Bp, D, Cp)
    return jnp.transpose(out, (1, 0, 2))[:, :B, :C]                     # (D, B, C)


def init_params(key, domain_num, feat_dims, class_num, dtype=jnp.float32):
    """Deterministic synthetic init matching nn.Linear parameter shapes."""
    kw, kb = jax.random.split(key)
    bound = 1.0 / jnp.sqrt(feat_dims)
    weights = jax.random.uniform(
        kw, (domain_num, class_num, feat_dims), dtype, -bound, bound)
    biases = jax.random.uniform(
        kb, (domain_num, 1, class_num), dtype, -bound, bound)
    return weights, biases


if __name__ == "__main__":
    # Small, module-consistent shapes.
    domain_num, feat_dims, class_num, batch = 3, 32, 8, 4

    key = jax.random.PRNGKey(0)
    k_params, k_multi, k_single = jax.random.split(key, 3)

    weights, biases = init_params(k_params, domain_num, feat_dims, class_num)

    # mode == 'multi': one feature matrix per domain head.
    feats_multi = jax.random.normal(
        k_multi, (domain_num, batch, feat_dims), jnp.float32)
    logits_multi = jax.block_until_ready(
        classifiers_forward(feats_multi, weights, biases, "multi"))

    # other mode: shared features through every head (fused into one GEMM).
    feats_single = jax.random.normal(k_single, (batch, feat_dims), jnp.float32)
    logits_single = jax.block_until_ready(
        classifiers_forward(feats_single, weights, biases, "single"))

    # Reference check against plain-JAX Linear semantics.
    for i in range(domain_num):
        ref_m = feats_multi[i] @ weights[i].T + biases[i, 0]
        ref_s = feats_single @ weights[i].T + biases[i, 0]
        assert jnp.allclose(logits_multi[i], ref_m, atol=1e-5, rtol=1e-5), i
        assert jnp.allclose(logits_single[i], ref_s, atol=1e-5, rtol=1e-5), i

    print("KERNEL_OK")
</pallas_src>

<mosaic_0001>
module attributes {stable_mosaic.version = 11 : i64} {
  func.func @_linear_kernel(%arg0: i32, %arg1: i32, %arg2: i32, %arg3: i32, %arg4: memref<1x8x128xf32, #tpu.memory_space<vmem>>, %arg5: memref<1x128x128xf32, #tpu.memory_space<vmem>>, %arg6: memref<1x1x128xf32, #tpu.memory_space<vmem>>, %arg7: memref<1x8x128xf32, #tpu.memory_space<vmem>>, %arg8: memref<8x128xf32, #tpu.memory_space<vmem>>) attributes {dimension_semantics = [#tpu.dimension_semantics<parallel>, #tpu.dimension_semantics<parallel>, #tpu.dimension_semantics<parallel>, #tpu.dimension_semantics<arbitrary>], iteration_bounds = array<i64: 3, 1, 1, 1>, scalar_prefetch = 0 : i64, scratch_operands = 1 : i64, tpu.core_type = #tpu.core_type<tc>, window_params = [{transform_indices = @transform_0, window_bounds = array<i64: 1, 8, 128>}, {transform_indices = @transform_1, window_bounds = array<i64: 1, 128, 128>}, {transform_indices = @transform_2, window_bounds = array<i64: 1, 1, 128>}, {transform_indices = @transform_3, window_bounds = array<i64: 1, 8, 128>}]} {
    %c0_i32 = arith.constant 0 : i32
    %0 = arith.cmpi eq, %arg3, %c0_i32 : i32
    %1 = arith.extui %0 : i1 to i32
    %c0_i32_0 = arith.constant 0 : i32
    %2 = arith.cmpi ne, %1, %c0_i32_0 : i32
    scf.if %2 {
      %cst_12 = arith.constant 0.000000e+00 : f32
      %14 = vector.broadcast %cst_12 : f32 to vector<8x128xf32>
      %c0_13 = arith.constant 0 : index
      %c0_14 = arith.constant 0 : index
      %15 = vector.load %arg8[%c0_13, %c0_14] : memref<8x128xf32, #tpu.memory_space<vmem>>, vector<8x128xf32>
      tpu.vector_store %arg8[%c0_13, %c0_14], %14 {strides = array<i32>} : memref<8x128xf32, #tpu.memory_space<vmem>>, vector<8x128xf32>,
    } else {
    }
    %c0 = arith.constant 0 : index
    %c0_1 = arith.constant 0 : index
    %3 = vector.load %arg8[%c0, %c0_1] : memref<8x128xf32, #tpu.memory_space<vmem>>, vector<8x128xf32>
    %c0_2 = arith.constant 0 : index
    %c0_3 = arith.constant 0 : index
    %c0_4 = arith.constant 0 : index
    %4 = vector.load %arg4[%c0_2, %c0_3, %c0_4] : memref<1x8x128xf32, #tpu.memory_space<vmem>>, vector<1x8x128xf32>
    %5 = vector.shape_cast %4 : vector<1x8x128xf32> to vector<8x128xf32>
    %c0_5 = arith.constant 0 : index
    %c0_6 = arith.constant 0 : index
    %c0_7 = arith.constant 0 : index
    %6 = vector.load %arg5[%c0_5, %c0_6, %c0_7] : memref<1x128x128xf32, #tpu.memory_space<vmem>>, vector<1x128x128xf32>
    %7 = vector.shape_cast %6 : vector<1x128x128xf32> to vector<128x128xf32>
    %cst = arith.constant dense<0.000000e+00> : vector<8x128xf32>
    %8 = tpu.matmul %5, %7, %cst {dimension_numbers = #tpu.dot_dimension_numbers<[1], [0], [0], [1], [0, 0, 1, 1], [], []>} : vector<8x128xf32>, vector<128x128xf32>, vector<8x128xf32> -> vector<8x128xf32>
    %9 = arith.addf %3, %8 : vector<8x128xf32>
    %c0_8 = arith.constant 0 : index
    %c0_9 = arith.constant 0 : index
    %10 = vector.load %arg8[%c0_8, %c0_9] : memref<8x128xf32, #tpu.memory_space<vmem>>, vector<8x128xf32>
    tpu.vector_store %arg8[%c0_8, %c0_9], %9 {strides = array<i32>} : memref<8x128xf32, #tpu.memory_space<vmem>>, vector<8x128xf32>,
    %c0_i32_10 = arith.constant 0 : i32
    %11 = arith.cmpi eq, %arg3, %c0_i32_10 : i32
    %12 = arith.extui %11 : i1 to i32
    %c0_i32_11 = arith.constant 0 : i32
    %13 = arith.cmpi ne, %12, %c0_i32_11 : i32
    scf.if %13 {
      %c0_12 = arith.constant 0 : index
      %c0_13 = arith.constant 0 : index
      %14 = vector.load %arg8[%c0_12, %c0_13] : memref<8x128xf32, #tpu.memory_space<vmem>>, vector<8x128xf32>
      %c0_14 = arith.constant 0 : index
      %c0_15 = arith.constant 0 : index
      %c0_16 = arith.constant 0 : index
      %15 = vector.load %arg6[%c0_14, %c0_15, %c0_16] : memref<1x1x128xf32, #tpu.memory_space<vmem>>, vector<1x1x128xf32>
      %16 = vector.shape_cast %15 : vector<1x1x128xf32> to vector<1x128xf32>
      %17 = vector.broadcast %16 : vector<1x128xf32> to vector<8x128xf32>
      %18 = arith.addf %14, %17 : vector<8x128xf32>
      %c0_17 = arith.constant 0 : index
      %c0_18 = arith.constant 0 : index
      %c0_19 = arith.constant 0 : index
      %19 = vector.load %arg7[%c0_17, %c0_18, %c0_19] : memref<1x8x128xf32, #tpu.memory_space<vmem>>, vector<1x8x128xf32>
      %20 = vector.shape_cast %19 : vector<1x8x128xf32> to vector<8x128xf32>
      %21 = vector.shape_cast %18 : vector<8x128xf32> to vector<1x8x128xf32>
      tpu.vector_store %arg7[%c0_17, %c0_18, %c0_19], %21 {strides = array<i32>} : memref<1x8x128xf32, #tpu.memory_space<vmem>>, vector<1x8x128xf32>,
    } else {
    }
    return
  }
  func.func @transform_0(%arg0: i32, %arg1: i32, %arg2: i32, %arg3: i32) -> (i32, i32, i32) {
    %c0_i32 = arith.constant 0 : i32
    return %arg0, %arg2, %arg3 : i32, i32, i32
  }
  func.func @transform_1(%arg0: i32, %arg1: i32, %arg2: i32, %arg3: i32) -> (i32, i32, i32) {
    %c0_i32 = arith.constant 0 : i32
    return %arg0, %arg3, %arg1 : i32, i32, i32
  }
  func.func @transform_2(%arg0: i32, %arg1: i32, %arg2: i32, %arg3: i32) -> (i32, i32, i32) {
    %c0_i32 = arith.constant 0 : i32
    %c0_i32_0 = arith.constant 0 : i32
    return %arg0, %c0_i32, %arg1 : i32, i32, i32
  }
  func.func @transform_3(%arg0: i32, %arg1: i32, %arg2: i32, %arg3: i32) -> (i32, i32, i32) {
    %c0_i32 = arith.constant 0 : i32
    return %arg0, %arg2, %arg1 : i32, i32, i32
  }
}

</mosaic_0001>

<llo_original>
// kernel: classifiers_forward.1
$region0: #{classifiers_forward.1}
  #allocation0 [shape = 'u32[]', space=smem, size = 0x4, offset = 0x4, fixed_abs, tag = 'smem constant byte address 0x4 - core index']
  #allocation1 [shape = 'u32[144,128]{1,0:T(1,128)}', space=vmem, size = 0x12000, scoped, tag = 'internal scratch']
  #allocation2 [shape = 'f32[8,128]{1,0:T(8,128)}', space=vmem, size = 0x1000, scoped, tag = 'scratch operand']
  %s0 = inlined_call_operand.vmem [shape: f32[3,8,128], index: 0, kind: input, shape index: {}]
  %s1 = inlined_call_operand.vmem [shape: f32[3,128,128], index: 1, kind: input, shape index: {}]
  %s2 = inlined_call_operand.vmem [shape: f32[3,1,128], index: 2, kind: input, shape index: {}]
  %s3 = inlined_call_operand.vmem [shape: f32[3,8,128], index: 3, kind: output, shape index: {}]
  %s4 = sld [smem:[#allocation0]]
  $region53: #{classifiers_forward.1} parent=0
    _
  %s6 = ssub.s32 1, %s4
  %s7 = scalar_select 0, %s6, %s4
  loop: start=0, step=1, limit=5
  $region2: #{classifiers_forward.1} parent=0 // loop_pre_header
    _
  $region3: #{classifiers_forward.1} parent=0 // loop_header
    %s9 = sphi 0, %s13
    %p10 = scmp.ge.s32.totalorder %s9, 5
    %s16 = sphi 0, %s42
    %s17 = sphi 0, %s38
    %s18 = sphi 0, %s34
    %s19 = sphi 0, %s30
    %s20 = sphi 0, %s16
    %s21 = sphi 0, %s17
    %s22 = sphi 0, %s18
    %s23 = sphi 0, %s19
    %s24 = sphi 0, %s20
    %s25 = sphi 0, %s21
    %s26 = sphi 0, %s22
    %s27 = sphi 0, %s23
    %s49 = sphi 0, %s51
    %s52 = sphi 0, %s49
    %s53 = sphi 0, %s52
    %s69 = sphi 0, %s53
    %s79 = sphi 0, %s81
    %s82 = sphi 0, %s79
    %s83 = sphi 0, %s82
    %s99 = sphi 0, %s83
    %s107 = sphi 0, %s109
    %s110 = sphi 0, %s107
    %s111 = sphi 0, %s110
    %s127 = sphi 0, %s111
    %s137 = sphi 0, %s139
    %s140 = sphi 0, %s137
    %s141 = sphi 0, %s140
    %s157 = sphi 0, %s141
  $region4: #{classifiers_forward.1} parent=0 // loop_header_branch
    %12 = sbr.rel (%p10) target = $region8
  $region5: #{classifiers_forward.1} parent=0 // loop_body
    %s14 = ssub.s32 %s9, 1
    %s15 = ssub.s32 %s9, 2
    %s28 = sadd.s32 1, %s19
    %p29 = scmp.ge.s32.totalorder %s28, 1
    %s30 = scalar_select %p29, 0, %s28
    %s31 = sadd.s32 1, %s18
    %s32 = scalar_select %p29, %s31, %s18
    %p33 = scmp.ge.s32.totalorder %s32, 1
    %s34 = scalar_select %p33, 0, %s32
    %s35 = sadd.s32 1, %s17
    %s36 = scalar_select %p33, %s35, %s17
    %p37 = scmp.ge.s32.totalorder %s36, 1
    %s38 = scalar_select %p37, 0, %s36
    %s39 = sadd.s32 1, %s16
    %s40 = scalar_select %p37, %s39, %s16
    %p41 = scmp.ge.s32.totalorder %s40, 3
    %s42 = scalar_select %p41, 0, %s40
    %s43 = ssub.s32 %s16, %s42
    %s44 = ssub.s32 %s18, %s34
    %s45 = sor.u32 %s43, %s44
    %s46 = ssub.s32 %s19, %s30
    %s47 = sor.u32 %s45, %s46
    %p48 = scmp.eq.s32.totalorder %s47, 0
    %s50 = sadd.s32 %s49, 1
    %s51 = scalar_select %p48, %s49, %s50
    %p54 = pneg %p48
    %p55 = scmp.eq.s32.totalorder %s9, 2
    %p56 = por %p54, %p55
    %p57 = scmp.ne.s32.totalorder %s49, %s52
    %p58 = scmp.eq.s32.totalorder %s9, 0
    %p59 = por %p57, %p58
    %p60 = scmp.ne.s32.totalorder %s49, %s52
    %p61 = scmp.eq.s32.totalorder %s14, 2
    %p62 = por %p60, %p61
    %p63 = scmp.ne.s32.totalorder %s52, %s53
    %p64 = scmp.eq.s32.totalorder %s14, 0
    %p65 = por %p63, %p64
    %p66 = scmp.ne.s32.totalorder %s52, %s53
    %p67 = scmp.eq.s32.totalorder %s15, 2
    %p68 = por %p66, %p67
    %p70 = scmp.ne.s32.totalorder %s53, %s69
    %p71 = scmp.eq.s32.totalorder %s15, 0
    %p72 = por %p70, %p71
    %s73 = ssub.s32 %s16, %s42
    %s74 = ssub.s32 %s19, %s30
    %s75 = sor.u32 %s73, %s74
    %s76 = ssub.s32 %s17, %s38
    %s77 = sor.u32 %s75, %s76
    %p78 = scmp.eq.s32.totalorder %s77, 0
    %s80 = sadd.s32 %s79, 1
    %s81 = scalar_select %p78, %s79, %s80
    %p84 = pneg %p78
    %p85 = scmp.eq.s32.totalorder %s9, 2
    %p86 = por %p84, %p85
    %p87 = scmp.ne.s32.totalorder %s79, %s82
    %p88 = scmp.eq.s32.totalorder %s9, 0
    %p89 = por %p87, %p88
    %p90 = scmp.ne.s32.totalorder %s79, %s82
    %p91 = scmp.eq.s32.totalorder %s14, 2
    %p92 = por %p90, %p91
    %p93 = scmp.ne.s32.totalorder %s82, %s83
    %p94 = scmp.eq.s32.totalorder %s14, 0
    %p95 = por %p93, %p94
    %p96 = scmp.ne.s32.totalorder %s82, %s83
    %p97 = scmp.eq.s32.totalorder %s15, 2
    %p98 = por %p96, %p97
    %p100 = scmp.ne.s32.totalorder %s83, %s99
    %p101 = scmp.eq.s32.totalorder %s15, 0
    %p102 = por %p100, %p101
    %s103 = ssub.s32 %s16, %s42
    %s104 = ssub.s32 %s17, %s38
    %s105 = sor.u32 %s103, %s104
    %p106 = scmp.eq.s32.totalorder %s105, 0
    %s108 = sadd.s32 %s107, 1
    %s109 = scalar_select %p106, %s107, %s108
    %p112 = pneg %p106
    %p113 = scmp.eq.s32.totalorder %s9, 2
    %p114 = por %p112, %p113
    %p115 = scmp.ne.s32.totalorder %s107, %s110
    %p116 = scmp.eq.s32.totalorder %s9, 0
    %p117 = por %p115, %p116
    %p118 = scmp.ne.s32.totalorder %s107, %s110
    %p119 = scmp.eq.s32.totalorder %s14, 2
    %p120 = por %p118, %p119
    %p121 = scmp.ne.s32.totalorder %s110, %s111
    %p122 = scmp.eq.s32.totalorder %s14, 0
    %p123 = por %p121, %p122
    %p124 = scmp.ne.s32.totalorder %s110, %s111
    %p125 = scmp.eq.s32.totalorder %s15, 2
    %p126 = por %p124, %p125
    %p128 = scmp.ne.s32.totalorder %s111, %s127
    %p129 = scmp.eq.s32.totalorder %s15, 0
    %p130 = por %p128, %p129
    %s131 = ssub.s32 %s16, %s42
    %s132 = ssub.s32 %s18, %s34
    %s133 = sor.u32 %s131, %s132
    %s134 = ssub.s32 %s17, %s38
    %s135 = sor.u32 %s133, %s134
    %p136 = scmp.eq.s32.totalorder %s135, 0
    %s138 = sadd.s32 %s137, 1
    %s139 = scalar_select %p136, %s137, %s138
    %p142 = pneg %p136
    %p143 = scmp.eq.s32.totalorder %s9, 2
    %p144 = por %p142, %p143
    %p145 = scmp.ne.s32.totalorder %s137, %s140
    %p146 = scmp.eq.s32.totalorder %s9, 0
    %p147 = por %p145, %p146
    %p148 = scmp.ne.s32.totalorder %s137, %s140
    %p149 = scmp.eq.s32.totalorder %s14, 2
    %p150 = por %p148, %p149
    %p151 = scmp.ne.s32.totalorder %s140, %s141
    %p152 = scmp.eq.s32.totalorder %s14, 0
    %p153 = por %p151, %p152
    %p154 = scmp.ne.s32.totalorder %s140, %s141
    %p155 = scmp.eq.s32.totalorder %s15, 2
    %p156 = por %p154, %p155
    %p158 = scmp.ne.s32.totalorder %s141, %s157
    %p159 = scmp.eq.s32.totalorder %s15, 0
    %p160 = por %p158, %p159
    %p161 = scmp.le.s32.totalorder 1, %s9
    %p162 = scmp.lt.s32.totalorder %s9, 4
    %p163 = pnand %p161, %p162
    %p164 = pneg %p163
    // Predicated region
    $region9: #{classifiers_forward.1} parent=5 // pred_check
      _
    $region10: #{classifiers_forward.1} parent=5 // pred_check_branch
      %166 = sbr.rel (%p163) target = $region12
    $region11: #{classifiers_forward.1} parent=5 // pred_region
      %s167 = ssub.s32 %s9, 1
    $region12: #{classifiers_forward.1} parent=5 // pred_fallthru
      _
    %p168 = scmp.lt.s32.totalorder %s9, 3
    // Predicated region
    $region13: #{classifiers_forward.1} parent=5 // pred_check
      %p169 = pneg %p168
    $region14: #{classifiers_forward.1} parent=5 // pred_check_branch
      %171 = sbr.rel (%p169) target = $region16
    $region15: #{classifiers_forward.1} parent=5 // pred_region
      // Predicated region
      $region17: #{classifiers_forward.1} parent=15 // pred_check
        %p172 = pneg %p59
      $region18: #{classifiers_forward.1} parent=15 // pred_check_branch
        %174 = sbr.rel (%p172) target = $region20
      $region19: #{classifiers_forward.1} parent=15 // pred_region
        %p175 = scmp.lt.s32.totalorder %s16, 2
        %s176 = scalar_select %p175, %s16, 2
        %p177 = scmp.lt.s32.totalorder %s18, 0
        %s178 = scalar_select %p177, %s18, 0
        %p179 = scmp.lt.s32.totalorder %s19, 0
        %s180 = scalar_select %p179, %s19, 0
        %s181 = sadd.s32 %s180, %s178
        %s182 = sadd.s32 %s181, %s176
        %s183 = smul.addr %s182, 8
        %s184 = scalar_lea.vmem %s0, %s183
      $region20: #{classifiers_forward.1} parent=15 // pred_fallthru
        _
      // Predicated region
      $region21: #{classifiers_forward.1} parent=15 // pred_check
        %p185 = pneg %p89
      $region22: #{classifiers_forward.1} parent=15 // pred_check_branch
        %187 = sbr.rel (%p185) target = $region24
      $region23: #{classifiers_forward.1} parent=15 // pred_region
        %s188 = smul.u32 16, %s19
        %p189 = scmp.lt.s32.totalorder %s16, 2
        %s190 = scalar_select %p189, %s16, 2
        %p191 = scmp.lt.s32.totalorder %s188, 15
        %s192 = scalar_select %p191, %s188, 15
        %p193 = scmp.lt.s32.totalorder %s17, 0
        %s194 = scalar_select %p193, %s17, 0
        %s195 = sadd.s32 %s194, %s192
        %s196 = smul.addr %s190, 16
        %s197 = sadd.s32 %s195, %s196
        %s198 = smul.addr %s197, 8
        %s199 = scalar_lea.vmem %s1, %s198
        %s200 = smul.u32 16, %s19
      $region24: #{classifiers_forward.1} parent=15 // pred_fallthru
        _
      // Predicated region
      $region25: #{classifiers_forward.1} parent=15 // pred_check
        %p201 = pneg %p117
      $region26: #{classifiers_forward.1} parent=15 // pred_check_branch
        %203 = sbr.rel (%p201) target = $region28
      $region27: #{classifiers_forward.1} parent=15 // pred_region
        %p204 = scmp.lt.s32.totalorder %s16, 2
        %s205 = scalar_select %p204, %s16, 2
        %p206 = scmp.lt.s32.totalorder %s17, 0
        %s207 = scalar_select %p206, %s17, 0
        %s208 = sadd.s32 %s207, %s205
        %s209 = scalar_lea.vmem %s2, %s208
      $region28: #{classifiers_forward.1} parent=15 // pred_fallthru
        _
    $region16: #{classifiers_forward.1} parent=5 // pred_fallthru
      _
    %p210 = scmp.le.s32.totalorder 1, %s9
    %p211 = scmp.lt.s32.totalorder %s9, 4
    %p212 = pnand %p210, %p211
    %p213 = pneg %p212
    // Predicated region
    $region29: #{classifiers_forward.1} parent=5 // pred_check
      _
    $region30: #{classifiers_forward.1} parent=5 // pred_check_branch
      %215 = sbr.rel (%p212) target = $region32
    $region31: #{classifiers_forward.1} parent=5 // pred_region
      %s216 = ssub.s32 %s9, 1
      %p217 = scmp.lt.s32.totalorder %s20, 2
      %s218 = scalar_select %p217, %s20, 2
      %p219 = scmp.lt.s32.totalorder %s22, 0
      %s220 = scalar_select %p219, %s22, 0
      %p221 = scmp.lt.s32.totalorder %s23, 0
      %s222 = scalar_select %p221, %s23, 0
      %s223 = sadd.s32 %s222, %s220
      %s224 = sadd.s32 %s223, %s218
      %s225 = smul.addr %s224, 8
      %s226 = scalar_lea.vmem %s0, %s225
      %p227 = pneg %p65
      %p228 = pneg %p62
      %s229 = smul.u32 16, %s23
      %p230 = scmp.lt.s32.totalorder %s20, 2
      %s231 = scalar_select %p230, %s20, 2
      %p232 = scmp.lt.s32.totalorder %s229, 15
      %s233 = scalar_select %p232, %s229, 15
      %p234 = scmp.lt.s32.totalorder %s21, 0
      %s235 = scalar_select %p234, %s21, 0
      %s236 = sadd.s32 %s235, %s233
      %s237 = smul.addr %s231, 16
      %s238 = sadd.s32 %s236, %s237
      %s239 = smul.addr %s238, 8
      %s240 = scalar_lea.vmem %s1, %s239
      %p241 = pneg %p95
      %p242 = pneg %p92
      %p243 = scmp.lt.s32.totalorder %s20, 2
      %s244 = scalar_select %p243, %s20, 2
      %p245 = scmp.lt.s32.totalorder %s21, 0
      %s246 = scalar_select %p245, %s21, 0
      %s247 = sadd.s32 %s246, %s244
      %s248 = scalar_lea.vmem %s2, %s247
      %p249 = pneg %p123
      %p250 = pneg %p120
      %p251 = pneg %p153
      %p252 = pneg %p150
      %p253 = scmp.lt.s32.totalorder %s20, 2
      %s254 = scalar_select %p253, %s20, 2
      %p255 = scmp.lt.s32.totalorder %s22, 0
      %s256 = scalar_select %p255, %s22, 0
      %p257 = scmp.lt.s32.totalorder %s21, 0
      %s258 = scalar_select %p257, %s21, 0
      %s259 = sadd.s32 %s258, %s256
      %s260 = sadd.s32 %s259, %s254
      %s261 = smul.addr %s260, 8
      %s262 = scalar_lea.vmem %s3, %s261
      %p263 = scmp.lt.s32.totalorder %s20, 2
      %s264 = scalar_select %p263, %s20, 2
      %p265 = scmp.lt.s32.totalorder %s22, 0
      %s266 = scalar_select %p265, %s22, 0
      %p267 = scmp.lt.s32.totalorder %s23, 0
      %s268 = scalar_select %p267, %s23, 0
      %s269 = sadd.s32 %s268, %s266
      %s270 = sadd.s32 %s269, %s264
      %s271 = smul.addr %s270, 8
      %s272 = scalar_lea.vmem %s0, %s271
      %s273 = smul.u32 16, %s23
      %p274 = scmp.lt.s32.totalorder %s20, 2
      %s275 = scalar_select %p274, %s20, 2
      %p276 = scmp.lt.s32.totalorder %s273, 15
      %s277 = scalar_select %p276, %s273, 15
      %p278 = scmp.lt.s32.totalorder %s21, 0
      %s279 = scalar_select %p278, %s21, 0
      %s280 = sadd.s32 %s279, %s277
      %s281 = smul.addr %s275, 16
      %s282 = sadd.s32 %s280, %s281
      %s283 = smul.addr %s282, 8
      %s284 = scalar_lea.vmem %s1, %s283
      %s285 = smul.u32 16, %s23
      %p286 = scmp.lt.s32.totalorder %s20, 2
      %s287 = scalar_select %p286, %s20, 2
      %p288 = scmp.lt.s32.totalorder %s21, 0
      %s289 = scalar_select %p288, %s21, 0
      %s290 = sadd.s32 %s289, %s287
      %s291 = scalar_lea.vmem %s2, %s290
      %p292 = scmp.lt.s32.totalorder %s20, 2
      %s293 = scalar_select %p292, %s20, 2
      %p294 = scmp.lt.s32.totalorder %s22, 0
      %s295 = scalar_select %p294, %s22, 0
      %p296 = scmp.lt.s32.totalorder %s21, 0
      %s297 = scalar_select %p296, %s21, 0
      %s298 = sadd.s32 %s297, %s295
      %s299 = sadd.s32 %s298, %s293
      %s300 = smul.addr %s299, 8
      %s301 = scalar_lea.vmem %s3, %s300
      %p302 = scmp.eq.s32.totalorder %s23, 0
      // Predicated region
      $region33: #{classifiers_forward.1} parent=31 // pred_check
        %p303 = pneg %p302
      $region34: #{classifiers_forward.1} parent=31 // pred_check_branch
        %305 = sbr.rel (%p303) target = $region36
      $region35: #{classifiers_forward.1} parent=31 // pred_region
        %306 = vst [vmem:[#allocation2] sm:$0xff] 0.0
      $region36: #{classifiers_forward.1} parent=31 // pred_fallthru
        _
      %v307 = vld [vmem:[#allocation2] sm:$0xff]
      %v308 = vld [vmem:[%s272] sm:$0xff]
      %v309 = vld [vmem:[%s284] sm:$0xff]
      %v310 = vld [vmem:[%s284 + $0x8] sm:$0xff]
      %v311 = vld [vmem:[%s284 + $0x10] sm:$0xff]
      %v312 = vld [vmem:[%s284 + $0x18] sm:$0xff]
      %v313 = vld [vmem:[%s284 + $0x20] sm:$0xff]
      %v314 = vld [vmem:[%s284 + $0x28] sm:$0xff]
      %v315 = vld [vmem:[%s284 + $0x30] sm:$0xff]
      %v316 = vld [vmem:[%s284 + $0x38] sm:$0xff]
      %v317 = vld [vmem:[%s284 + $0x40] sm:$0xff]
      %v318 = vld [vmem:[%s284 + $0x48] sm:$0xff]
      %v319 = vld [vmem:[%s284 + $0x50] sm:$0xff]
      %v320 = vld [vmem:[%s284 + $0x58] sm:$0xff]
      %v321 = vld [vmem:[%s284 + $0x60] sm:$0xff]
      %v322 = vld [vmem:[%s284 + $0x68] sm:$0xff]
      %v323 = vld [vmem:[%s284 + $0x70] sm:$0xff]
      %v324 = vld [vmem:[%s284 + $0x78] sm:$0xff]
      %325 = vmatprep.subr.mxu0 0.0
      %326 = vmatpush1.msra.mxu0 %v309
      %327 = vmatprep.subr.mxu0 0.0
      %328 = vmatpush1.msra.mxu0 %v310
      %329 = vmatprep.subr.mxu0 0.0
      %330 = vmatpush1.msra.mxu0 %v311
      %331 = vmatprep.subr.mxu0 0.0
      %332 = vmatpush1.msra.mxu0 %v312
      %333 = vmatprep.subr.mxu0 0.0
      %334 = vmatpush1.msra.mxu0 %v313
      %335 = vmatprep.subr.mxu0 0.0
      %336 = vmatpush1.msra.mxu0 %v314
      %337 = vmatprep.subr.mxu0 0.0
      %338 = vmatpush1.msra.mxu0 %v315
      %339 = vmatprep.subr.mxu0 0.0
      %340 = vmatpush1.msra.mxu0 %v316
      %341 = vmatprep.subr.mxu0 0.0
      %342 = vmatpush1.msra.mxu0 %v317
      %343 = vmatprep.subr.mxu0 0.0
      %344 = vmatpush1.msra.mxu0 %v318
      %345 = vmatprep.subr.mxu0 0.0
      %346 = vmatpush1.msra.mxu0 %v319
      %347 = vmatprep.subr.mxu0 0.0
      %348 = vmatpush1.msra.mxu0 %v320
      %349 = vmatprep.subr.mxu0 0.0
      %350 = vmatpush1.msra.mxu0 %v321
      %351 = vmatprep.subr.mxu0 0.0
      %352 = vmatpush1.msra.mxu0 %v322
      %353 = vmatprep.subr.mxu0 0.0
      %354 = vmatpush1.msra.mxu0 %v323
      %355 = vmatprep.subr.mxu0 0.0
      %356 = vmatpush1.msra.mxu0 %v324
      %357 = vmatprep.subr.mxu0 0.0
      %358 = vmatpush1.msra.mxu0 0.0
      %359 = vmatprep.subr.mxu0 0.0
      %360 = vmatpush1.msra.mxu0 0.0
      %361 = vmatprep.subr.mxu0 0.0
      %362 = vmatpush1.msra.mxu0 0.0
      %363 = vmatprep.subr.mxu0 0.0
      %364 = vmatpush1.msra.mxu0 0.0
      %365 = vmatprep.subr.mxu0 0.0
      %366 = vmatpush1.msra.mxu0 0.0
      %367 = vmatprep.subr.mxu0 0.0
      %368 = vmatpush1.msra.mxu0 0.0
      %369 = vmatprep.subr.mxu0 0.0
      %370 = vmatpush1.msra.mxu0 0.0
      %371 = vmatprep.subr.mxu0 0.0
      %372 = vmatpush1.msra.mxu0 0.0
      %373 = vmatprep.subr.mxu0 0.0
      %374 = vmatpush1.msra.mxu0 0.0
      %375 = vmatprep.subr.mxu0 0.0
      %376 = vmatpush1.msra.mxu0 0.0
      %377 = vmatprep.subr.mxu0 0.0
      %378 = vmatpush1.msra.mxu0 0.0
      %379 = vmatprep.subr.mxu0 0.0
      %380 = vmatpush1.msra.mxu0 0.0
      %381 = vmatprep.subr.mxu0 0.0
      %382 = vmatpush1.msra.mxu0 0.0
      %383 = vmatprep.subr.mxu0 0.0
      %384 = vmatpush1.msra.mxu0 0.0
      %385 = vmatprep.subr.mxu0 0.0
      %386 = vmatpush1.msra.mxu0 0.0
      %387 = vmatprep.subr.mxu0 0.0
      %388 = vmatpush1.msra.mxu0 0.0
      %389 = vmatprep.mubr.f32.mxu0 0.0
      %390 = vmatmul.mubr.f32.gmra.mrb[0].mxu0 %v308
      %v391 = vpop.f32.mrb[0].mxu0
      %v392 = vadd.f32 0.0, %v391
      %v393 = vpop.f32.mrb[0].mxu0
      %394 = vdwg.mxu0
      %v395 = vadd.f32 %v307, %v392
      %396 = vst [vmem:[#allocation2] sm:$0xff] %v395
      // Predicated region
      $region37: #{classifiers_forward.1} parent=31 // pred_check
        %p397 = pneg %p302
      $region38: #{classifiers_forward.1} parent=31 // pred_check_branch
        %399 = sbr.rel (%p397) target = $region40
      $region39: #{classifiers_forward.1} parent=31 // pred_region
        %v400 = vld [vmem:[#allocation2] sm:$0xff]
        %v401 = vld [vmem:[%s291] sm:$0x1]
        %v403 = vlaneseq
        %v404 = vshrl.u32 %v403, 7
        %v405 = vsub.s32 0, %v404
        %v406 = vrot.slane %v401, %v405
        %v408 = vadd.f32 %v400, %v406
        %409 = vst [vmem:[%s301] sm:$0xff] %v408
      $region40: #{classifiers_forward.1} parent=31 // pred_fallthru
        _
      %p410 = scmp.lt.s32.totalorder %s20, 2
      %s411 = scalar_select %p410, %s20, 2
      %p412 = scmp.lt.s32.totalorder %s22, 0
      %s413 = scalar_select %p412, %s22, 0
      %p414 = scmp.lt.s32.totalorder %s21, 0
      %s415 = scalar_select %p414, %s21, 0
      %s416 = sadd.s32 %s415, %s413
      %s417 = sadd.s32 %s416, %s411
      %s418 = smul.addr %s417, 8
      %s419 = scalar_lea.vmem %s3, %s418
      // Predicated region
      $region41: #{classifiers_forward.1} parent=31 // pred_check
        %p420 = pneg %p150
      $region42: #{classifiers_forward.1} parent=31 // pred_check_branch
        %422 = sbr.rel (%p420) target = $region44
      $region43: #{classifiers_forward.1} parent=31 // pred_region
        _
      $region44: #{classifiers_forward.1} parent=31 // pred_fallthru
        _
    $region32: #{classifiers_forward.1} parent=5 // pred_fallthru
      _
    %p423 = scmp.le.s32.totalorder 2, %s9
    // Predicated region
    $region45: #{classifiers_forward.1} parent=5 // pred_check
      %p424 = pneg %p423
    $region46: #{classifiers_forward.1} parent=5 // pred_check_branch
      %426 = sbr.rel (%p424) target = $region48
    $region47: #{classifiers_forward.1} parent=5 // pred_region
      %s427 = ssub.s32 %s9, 2
      // Predicated region
      $region49: #{classifiers_forward.1} parent=47 // pred_check
        %p428 = pneg %p156
      $region50: #{classifiers_forward.1} parent=47 // pred_check_branch
        %430 = sbr.rel (%p428) target = $region52
      $region51: #{classifiers_forward.1} parent=47 // pred_region
        %p431 = scmp.lt.s32.totalorder %s24, 2
        %s432 = scalar_select %p431, %s24, 2
        %p433 = scmp.lt.s32.totalorder %s26, 0
        %s434 = scalar_select %p433, %s26, 0
        %p435 = scmp.lt.s32.totalorder %s25, 0
        %s436 = scalar_select %p435, %s25, 0
        %s437 = sadd.s32 %s436, %s434
        %s438 = sadd.s32 %s437, %s432
        %s439 = smul.addr %s438, 8
        %s440 = scalar_lea.vmem %s3, %s439
      $region52: #{classifiers_forward.1} parent=47 // pred_fallthru
        _
    $region48: #{classifiers_forward.1} parent=5 // pred_fallthru
      _
  $region6: #{classifiers_forward.1} parent=0 // loop_footer
    %s13 = sadd.s32 1, %s9
  $region7: #{classifiers_forward.1} parent=0 // loop_footer_branch
    %8 = sbr.rel target = $region3
  $region8: #{classifiers_forward.1} parent=0 // loop_exit
    _

</llo_original>
